<compile_context>
chip_gen: v7x
topology: tpu7x:2x2x1
jax: 0.10.0
libtpu: 0.0.40
codegen_flags: <defaults>
</compile_context>

<pallas_src>
import functools

import jax
import jax.numpy as jnp
from jax import lax
from jax.experimental import pallas as pl
from jax.experimental.pallas import tpu as pltpu


def _round_up(n, m):
    return ((n + m - 1) // m) * m


def _vmem_budget_bytes():
    """Generation-aware VMEM budget (physical capacity minus headroom)."""
    try:
        phys = int(pltpu.get_tpu_info().vmem_capacity_bytes)
    except Exception:
        phys = 64 * 1024 * 1024          # conservative (v7x-sized) fallback
    return max(32 * 1024 * 1024, phys - 16 * 1024 * 1024)


def _est_vmem_bytes(t_chunk, b_tile, d_hid_pad, d_out_pad):
    """Rough per-grid-step VMEM footprint (double-buffered pipeline buffers)."""
    bf, f = 2, 4
    px_h = 2 * t_chunk * b_tile * d_hid_pad * bf
    px_o = 2 * t_chunk * b_tile * d_out_pad * bf
    out = 2 * t_chunk * b_tile * d_out_pad * f
    h0 = 2 * b_tile * d_hid_pad * f
    wh = 2 * (d_hid_pad * d_hid_pad + d_hid_pad * d_out_pad) * bf
    scratch = b_tile * d_hid_pad * f + t_chunk * b_tile * d_hid_pad * f
    return px_h + px_o + out + h0 + wh + scratch


def _rnn_chunk_kernel(px_h_ref, px_o_ref, h0_ref, wh_h_ref, wh_o_ref,
                      out_ref, h_carry, h_stash, *, t_chunk, unroll):
    """One grid step == one (batch-tile, time-chunk).

    px_h_ref: (t_chunk, B_TILE, D_hid_pad) bf16   x @ Wih_x.T + b_i2h (precomputed)
    px_o_ref: (t_chunk, B_TILE, D_out_pad) bf16   x @ Wio_x.T + b_i2o (precomputed)
    h0_ref:   (B_TILE, D_hid_pad) f32             initial hidden for this batch tile
    wh_h_ref: (D_hid_pad, D_hid_pad) bf16         hidden -> hidden weights
    wh_o_ref: (D_hid_pad, D_out_pad) bf16         hidden -> output weights
    out_ref:  (t_chunk, B_TILE, D_out_pad) f32
    h_carry:  (B_TILE, D_hid_pad) f32 scratch     hidden carried across time chunks
    h_stash:  (t_chunk, B_TILE, D_hid_pad) f32    old-h stash for the output proj
    """
    c = pl.program_id(1)                          # time-chunk index (sequential axis)

    @pl.when(c == 0)
    def _():
        # new batch tile -> reset the carried hidden state
        h_carry[...] = h0_ref[...].astype(jnp.float32)

    wh_h = wh_h_ref[...]                          # load recurrent weights once per chunk

    def step(t, h):
        # `h` is the OLD hidden for step t; stash it for the batched output
        # projection below, then advance with a single narrow MXU matmul.
        h_stash[t] = h
        h_bf = h.astype(jnp.bfloat16)
        return px_h_ref[t].astype(jnp.float32) + jnp.dot(
            h_bf, wh_h, preferred_element_type=jnp.float32)

    h_final = lax.fori_loop(0, t_chunk, step, h_carry[...], unroll=unroll)
    h_carry[...] = h_final                        # single scratch write per chunk

    # Output projection for the whole chunk: one large, fully pipelined MXU
    # matmul off the serial critical path (out_t uses the OLD h at step t).
    b_tile, d_hid = h_stash.shape[1], h_stash.shape[2]
    d_out = out_ref.shape[2]
    h_all = h_stash[...].reshape(t_chunk * b_tile, d_hid).astype(jnp.bfloat16)
    proj = jnp.dot(h_all, wh_o_ref[...], preferred_element_type=jnp.float32)
    out_ref[...] = (px_o_ref[...].astype(jnp.float32)
                    + proj.reshape(t_chunk, b_tile, d_out)).astype(out_ref.dtype)


def rnn_layer_forward(x, hidden, params, *, direction=1, t_chunk=64):
    """x: (B, T, dim_input), hidden: (B, dim_hidden) -> (B, T, dim_output)."""
    w_i2h, b_i2h = params["w_i2h"], params["b_i2h"]
    w_i2o, b_i2o = params["w_i2o"], params["b_i2o"]

    B, T, D_in = x.shape
    D_hid = hidden.shape[1]
    D_out = w_i2o.shape[0]

    if direction != 1:
        # reversed PyTorch loop + append == forward loop over time-reversed input
        x = x[:, ::-1, :]

    f32, bf16 = jnp.float32, jnp.bfloat16

    # ---------------- padded, tile-friendly geometry ----------------
    D_hid_pad = _round_up(D_hid, 128)
    D_out_pad = _round_up(D_out, 128)

    B_pad8 = _round_up(B, 8)
    if B_pad8 <= 8:
        B_TILE = B_pad8
    else:
        # >= 2 batch tiles so both v7x TensorCores get work; cap at 256 rows
        # (fills the 256-wide MXUs on v6e/v7x without blowing up vregs).
        B_TILE = min(256, _round_up((B_pad8 + 1) // 2, 8))
    B_pad = _round_up(B_pad8, B_TILE)

    # ---- time chunking: clamp, fit the VMEM budget, prefer a divisor of T ----
    budget = _vmem_budget_bytes()
    t_chunk = max(1, min(t_chunk, T))
    while t_chunk > 8 and _est_vmem_bytes(t_chunk, B_TILE, D_hid_pad, D_out_pad) > budget:
        t_chunk = max(8, t_chunk // 2)
    best_div = max(d for d in range(1, t_chunk + 1) if T % d == 0)
    if 2 * best_div >= t_chunk:
        t_chunk = best_div               # avoid wasted padded serial tail steps
    T_pad = _round_up(T, t_chunk)

    # ---------------- padded hidden-path weights (bf16 MXU operands) --------
    # Zero-padded rows/cols keep the padded hidden lanes at zero and prevent
    # them from leaking into real outputs.
    wh_h = jnp.zeros((D_hid_pad, D_hid_pad), f32)
    wh_h = wh_h.at[:D_hid, :D_hid].set(jnp.transpose(w_i2h[:, D_in:]).astype(f32))
    wh_o = jnp.zeros((D_hid_pad, D_out_pad), f32)
    wh_o = wh_o.at[:D_hid, :D_out].set(jnp.transpose(w_i2o[:, D_in:]).astype(f32))
    wh_h = wh_h.astype(bf16)
    wh_o = wh_o.astype(bf16)

    # ------ hoisted input projection (transpose the narrow x FIRST) ---------
    x_t = jnp.transpose(x, (1, 0, 2)).astype(f32).reshape(T * B, D_in)   # (T*B, D_in)
    px_h = x_t @ jnp.transpose(w_i2h[:, :D_in]).astype(f32) + b_i2h.astype(f32)
    px_o = x_t @ jnp.transpose(w_i2o[:, :D_in]).astype(f32) + b_i2o.astype(f32)
    px_h = jnp.pad(px_h.reshape(T, B, D_hid),
                   ((0, T_pad - T), (0, B_pad - B), (0, D_hid_pad - D_hid))
                   ).astype(bf16)                                        # (T_pad,B_pad,Dh)
    px_o = jnp.pad(px_o.reshape(T, B, D_out),
                   ((0, T_pad - T), (0, B_pad - B), (0, D_out_pad - D_out))
                   ).astype(bf16)                                        # (T_pad,B_pad,Do)

    # padded initial hidden (kept f32; the recurrence carry stays f32)
    h0 = jnp.zeros((B_pad, D_hid_pad), f32)
    h0 = h0.at[:B, :D_hid].set(hidden.astype(f32))

    nb = B_pad // B_TILE
    nc = T_pad // t_chunk
    unroll = min(8, t_chunk)            # partial unroll: LLO visibility w/o code bloat

    kernel = functools.partial(_rnn_chunk_kernel, t_chunk=t_chunk, unroll=unroll)

    out_tm = pl.pallas_call(
        kernel,
        out_shape=jax.ShapeDtypeStruct((T_pad, B_pad, D_out_pad), f32),
        grid_spec=pltpu.PrefetchScalarGridSpec(
            num_scalar_prefetch=0,
            grid=(nb, nc),                          # (batch tiles, time chunks)
            in_specs=[
                pl.BlockSpec((t_chunk, B_TILE, D_hid_pad), lambda b, c: (c, b, 0)),
                pl.BlockSpec((t_chunk, B_TILE, D_out_pad), lambda b, c: (c, b, 0)),
                pl.BlockSpec((B_TILE, D_hid_pad), lambda b, c: (b, 0)),
                # constant block index -> DMA'd once, never re-fetched
                pl.BlockSpec((D_hid_pad, D_hid_pad), lambda b, c: (0, 0)),
                pl.BlockSpec((D_hid_pad, D_out_pad), lambda b, c: (0, 0)),
            ],
            out_specs=pl.BlockSpec((t_chunk, B_TILE, D_out_pad),
                                   lambda b, c: (c, b, 0)),
            scratch_shapes=[pltpu.VMEM((B_TILE, D_hid_pad), jnp.float32),
                            pltpu.VMEM((t_chunk, B_TILE, D_hid_pad), jnp.float32)],
        ),
        compiler_params=pltpu.CompilerParams(
            # batch tiles are independent (megacore shards them on v7x);
            # time chunks carry the hidden state -> sequential.
            dimension_semantics=("parallel", "arbitrary"),
            vmem_limit_bytes=int(budget)),
    )(px_h, px_o, h0, wh_h, wh_o)

    # strip padding, back to batch-first (B, T, D_out)
    return jnp.transpose(out_tm[:T, :B, :D_out], (1, 0, 2))


def _reference_forward(x, hidden, params, *, direction=1):
    """Pure-JAX f32 reference mirroring the PyTorch loop."""
    w_i2h, b_i2h = params["w_i2h"], params["b_i2h"]
    w_i2o, b_i2o = params["w_i2o"], params["b_i2o"]
    T = x.shape[1]
    order = range(T) if direction == 1 else range(T - 1, -1, -1)
    outs = []
    h = hidden
    for i in order:
        combined = jnp.concatenate([x[:, i, :], h], axis=1)
        h = combined @ w_i2h.T + b_i2h
        outs.append(combined @ w_i2o.T + b_i2o)
    return jnp.stack(outs, axis=1)


def init_params(key, dim_input, dim_hidden, dim_output):
    """Deterministic init mimicking nn.Linear default (uniform ±1/sqrt(fan_in))."""
    fan_in = dim_input + dim_hidden
    bound = 1.0 / jnp.sqrt(jnp.float32(fan_in))
    k1, k2, k3, k4 = jax.random.split(key, 4)
    return {
        "w_i2h": jax.random.uniform(k1, (dim_hidden, fan_in), jnp.float32, -bound, bound),
        "b_i2h": jax.random.uniform(k2, (dim_hidden,), jnp.float32, -bound, bound),
        "w_i2o": jax.random.uniform(k3, (dim_output, fan_in), jnp.float32, -bound, bound),
        "b_i2o": jax.random.uniform(k4, (dim_output,), jnp.float32, -bound, bound),
    }


if __name__ == "__main__":
    key = jax.random.PRNGKey(0)
    B, T, D_in, D_hid, D_out = 2, 8, 16, 32, 8

    k_x, k_p = jax.random.split(key)
    x = jax.random.normal(k_x, (B, T, D_in), dtype=jnp.float32)
    hidden = jnp.zeros((B, D_hid), dtype=jnp.float32)        # init_hidden
    params = init_params(k_p, D_in, D_hid, D_out)

    for direction in (1, -1):                                # test both loop directions
        fwd = jax.jit(functools.partial(rnn_layer_forward, direction=direction))
        out = jax.block_until_ready(fwd(x, hidden, params))
        ref = _reference_forward(x, hidden, params, direction=direction)
        assert out.shape == (B, T, D_out)
        # bf16 MXU operands: recurrence error compounds over T, so the check is
        # looser than the old f32-only 1e-4 tolerance.
        assert jnp.allclose(out, ref, atol=5e-2, rtol=5e-2), f"mismatch dir={direction}"

    print("KERNEL_OK")
</pallas_src>

<mosaic_0001>
module attributes {stable_mosaic.version = 11 : i64} {
  func.func @_rnn_chunk_kernel(%arg0: i32, %arg1: i32, %arg2: memref<8x8x128xbf16, #tpu.memory_space<vmem>>, %arg3: memref<8x8x128xbf16, #tpu.memory_space<vmem>>, %arg4: memref<8x128xf32, #tpu.memory_space<vmem>>, %arg5: memref<128x128xbf16, #tpu.memory_space<vmem>>, %arg6: memref<128x128xbf16, #tpu.memory_space<vmem>>, %arg7: memref<8x8x128xf32, #tpu.memory_space<vmem>>, %arg8: memref<8x128xf32, #tpu.memory_space<vmem>>, %arg9: memref<8x8x128xf32, #tpu.memory_space<vmem>>) attributes {dimension_semantics = [#tpu.dimension_semantics<parallel>, #tpu.dimension_semantics<arbitrary>], iteration_bounds = array<i64: 1, 1>, scalar_prefetch = 0 : i64, scratch_operands = 2 : i64, tpu.core_type = #tpu.core_type<tc>, window_params = [{transform_indices = @transform_0, window_bounds = array<i64: 8, 8, 128>}, {transform_indices = @transform_1, window_bounds = array<i64: 8, 8, 128>}, {transform_indices = @transform_2, window_bounds = array<i64: 8, 128>}, {pipeline_mode = #tpu.pipeline_mode<synchronous>, transform_indices = @transform_3, window_bounds = array<i64: 128, 128>}, {pipeline_mode = #tpu.pipeline_mode<synchronous>, transform_indices = @transform_4, window_bounds = array<i64: 128, 128>}, {transform_indices = @transform_5, window_bounds = array<i64: 8, 8, 128>}]} {
    %c0_i32 = arith.constant 0 : i32
    %0 = arith.cmpi eq, %arg1, %c0_i32 : i32
    %1 = arith.extui %0 : i1 to i32
    %c0_i32_0 = arith.constant 0 : i32
    %2 = arith.cmpi ne, %1, %c0_i32_0 : i32
    scf.if %2 {
      %c0_58 = arith.constant 0 : index
      %c0_59 = arith.constant 0 : index
      %104 = vector.load %arg4[%c0_58, %c0_59] : memref<8x128xf32, #tpu.memory_space<vmem>>, vector<8x128xf32>
      %c0_60 = arith.constant 0 : index
      %c0_61 = arith.constant 0 : index
      %105 = vector.load %arg8[%c0_60, %c0_61] : memref<8x128xf32, #tpu.memory_space<vmem>>, vector<8x128xf32>
      tpu.vector_store %arg8[%c0_60, %c0_61], %104 {strides = array<i32>} : memref<8x128xf32, #tpu.memory_space<vmem>>, vector<8x128xf32>,
    } else {
    }
    %c0 = arith.constant 0 : index
    %c0_1 = arith.constant 0 : index
    %3 = vector.load %arg5[%c0, %c0_1] : memref<128x128xbf16, #tpu.memory_space<vmem>>, vector<128x128xbf16>
    %c0_2 = arith.constant 0 : index
    %c0_3 = arith.constant 0 : index
    %4 = vector.load %arg8[%c0_2, %c0_3] : memref<8x128xf32, #tpu.memory_space<vmem>>, vector<8x128xf32>
    %c0_i32_4 = arith.constant 0 : i32
    %5 = arith.index_cast %c0_i32_4 : i32 to index
    %c0_5 = arith.constant 0 : index
    %c0_6 = arith.constant 0 : index
    %6 = vector.load %arg9[%5, %c0_5, %c0_6] : memref<8x8x128xf32, #tpu.memory_space<vmem>>, vector<1x8x128xf32>
    %7 = vector.shape_cast %6 : vector<1x8x128xf32> to vector<8x128xf32>
    %8 = vector.shape_cast %4 : vector<8x128xf32> to vector<1x8x128xf32>
    tpu.vector_store %arg9[%5, %c0_5, %c0_6], %8 {strides = array<i32>} : memref<8x8x128xf32, #tpu.memory_space<vmem>>, vector<1x8x128xf32>,
    %9 = arith.truncf %4 : vector<8x128xf32> to vector<8x128xbf16>
    %10 = arith.index_cast %c0_i32_4 : i32 to index
    %c0_7 = arith.constant 0 : index
    %c0_8 = arith.constant 0 : index
    %11 = vector.load %arg2[%10, %c0_7, %c0_8] : memref<8x8x128xbf16, #tpu.memory_space<vmem>>, vector<1x8x128xbf16>
    %12 = vector.shape_cast %11 : vector<1x8x128xbf16> to vector<8x128xbf16>
    %13 = arith.extf %12 : vector<8x128xbf16> to vector<8x128xf32>
    %cst = arith.constant dense<0.000000e+00> : vector<8x128xf32>
    %14 = tpu.matmul %9, %3, %cst {dimension_numbers = #tpu.dot_dimension_numbers<[1], [0], [0], [1], [0, 0, 1, 1], [], []>} : vector<8x128xbf16>, vector<128x128xbf16>, vector<8x128xf32> -> vector<8x128xf32>
    %15 = arith.addf %13, %14 : vector<8x128xf32>
    %c1_i32 = arith.constant 1 : i32
    %16 = arith.index_cast %c1_i32 : i32 to index
    %c0_9 = arith.constant 0 : index
    %c0_10 = arith.constant 0 : index
    %17 = vector.load %arg9[%16, %c0_9, %c0_10] : memref<8x8x128xf32, #tpu.memory_space<vmem>>, vector<1x8x128xf32>
    %18 = vector.shape_cast %17 : vector<1x8x128xf32> to vector<8x128xf32>
    %19 = vector.shape_cast %15 : vector<8x128xf32> to vector<1x8x128xf32>
    tpu.vector_store %arg9[%16, %c0_9, %c0_10], %19 {strides = array<i32>} : memref<8x8x128xf32, #tpu.memory_space<vmem>>, vector<1x8x128xf32>,
    %20 = arith.truncf %15 : vector<8x128xf32> to vector<8x128xbf16>
    %21 = arith.index_cast %c1_i32 : i32 to index
    %c0_11 = arith.constant 0 : index
    %c0_12 = arith.constant 0 : index
    %22 = vector.load %arg2[%21, %c0_11, %c0_12] : memref<8x8x128xbf16, #tpu.memory_space<vmem>>, vector<1x8x128xbf16>
    %23 = vector.shape_cast %22 : vector<1x8x128xbf16> to vector<8x128xbf16>
    %24 = arith.extf %23 : vector<8x128xbf16> to vector<8x128xf32>
    %cst_13 = arith.constant dense<0.000000e+00> : vector<8x128xf32>
    %25 = tpu.matmul %20, %3, %cst_13 {dimension_numbers = #tpu.dot_dimension_numbers<[1], [0], [0], [1], [0, 0, 1, 1], [], []>} : vector<8x128xbf16>, vector<128x128xbf16>, vector<8x128xf32> -> vector<8x128xf32>
    %26 = arith.addf %24, %25 : vector<8x128xf32>
    %c2_i32 = arith.constant 2 : i32
    %27 = arith.index_cast %c2_i32 : i32 to index
    %c0_14 = arith.constant 0 : index
    %c0_15 = arith.constant 0 : index
    %28 = vector.load %arg9[%27, %c0_14, %c0_15] : memref<8x8x128xf32, #tpu.memory_space<vmem>>, vector<1x8x128xf32>
    %29 = vector.shape_cast %28 : vector<1x8x128xf32> to vector<8x128xf32>
    %30 = vector.shape_cast %26 : vector<8x128xf32> to vector<1x8x128xf32>
    tpu.vector_store %arg9[%27, %c0_14, %c0_15], %30 {strides = array<i32>} : memref<8x8x128xf32, #tpu.memory_space<vmem>>, vector<1x8x128xf32>,
    %31 = arith.truncf %26 : vector<8x128xf32> to vector<8x128xbf16>
    %32 = arith.index_cast %c2_i32 : i32 to index
    %c0_16 = arith.constant 0 : index
    %c0_17 = arith.constant 0 : index
    %33 = vector.load %arg2[%32, %c0_16, %c0_17] : memref<8x8x128xbf16, #tpu.memory_space<vmem>>, vector<1x8x128xbf16>
    %34 = vector.shape_cast %33 : vector<1x8x128xbf16> to vector<8x128xbf16>
    %35 = arith.extf %34 : vector<8x128xbf16> to vector<8x128xf32>
    %cst_18 = arith.constant dense<0.000000e+00> : vector<8x128xf32>
    %36 = tpu.matmul %31, %3, %cst_18 {dimension_numbers = #tpu.dot_dimension_numbers<[1], [0], [0], [1], [0, 0, 1, 1], [], []>} : vector<8x128xbf16>, vector<128x128xbf16>, vector<8x128xf32> -> vector<8x128xf32>
    %37 = arith.addf %35, %36 : vector<8x128xf32>
    %c3_i32 = arith.constant 3 : i32
    %38 = arith.index_cast %c3_i32 : i32 to index
    %c0_19 = arith.constant 0 : index
    %c0_20 = arith.constant 0 : index
    %39 = vector.load %arg9[%38, %c0_19, %c0_20] : memref<8x8x128xf32, #tpu.memory_space<vmem>>, vector<1x8x128xf32>
    %40 = vector.shape_cast %39 : vector<1x8x128xf32> to vector<8x128xf32>
    %41 = vector.shape_cast %37 : vector<8x128xf32> to vector<1x8x128xf32>
    tpu.vector_store %arg9[%38, %c0_19, %c0_20], %41 {strides = array<i32>} : memref<8x8x128xf32, #tpu.memory_space<vmem>>, vector<1x8x128xf32>,
    %42 = arith.truncf %37 : vector<8x128xf32> to vector<8x128xbf16>
    %43 = arith.index_cast %c3_i32 : i32 to index
    %c0_21 = arith.constant 0 : index
    %c0_22 = arith.constant 0 : index
    %44 = vector.load %arg2[%43, %c0_21, %c0_22] : memref<8x8x128xbf16, #tpu.memory_space<vmem>>, vector<1x8x128xbf16>
    %45 = vector.shape_cast %44 : vector<1x8x128xbf16> to vector<8x128xbf16>
    %46 = arith.extf %45 : vector<8x128xbf16> to vector<8x128xf32>
    %cst_23 = arith.constant dense<0.000000e+00> : vector<8x128xf32>
    %47 = tpu.matmul %42, %3, %cst_23 {dimension_numbers = #tpu.dot_dimension_numbers<[1], [0], [0], [1], [0, 0, 1, 1], [], []>} : vector<8x128xbf16>, vector<128x128xbf16>, vector<8x128xf32> -> vector<8x128xf32>
    %48 = arith.addf %46, %47 : vector<8x128xf32>
    %c4_i32 = arith.constant 4 : i32
    %49 = arith.index_cast %c4_i32 : i32 to index
    %c0_24 = arith.constant 0 : index
    %c0_25 = arith.constant 0 : index
    %50 = vector.load %arg9[%49, %c0_24, %c0_25] : memref<8x8x128xf32, #tpu.memory_space<vmem>>, vector<1x8x128xf32>
    %51 = vector.shape_cast %50 : vector<1x8x128xf32> to vector<8x128xf32>
    %52 = vector.shape_cast %48 : vector<8x128xf32> to vector<1x8x128xf32>
    tpu.vector_store %arg9[%49, %c0_24, %c0_25], %52 {strides = array<i32>} : memref<8x8x128xf32, #tpu.memory_space<vmem>>, vector<1x8x128xf32>,
    %53 = arith.truncf %48 : vector<8x128xf32> to vector<8x128xbf16>
    %54 = arith.index_cast %c4_i32 : i32 to index
    %c0_26 = arith.constant 0 : index
    %c0_27 = arith.constant 0 : index
    %55 = vector.load %arg2[%54, %c0_26, %c0_27] : memref<8x8x128xbf16, #tpu.memory_space<vmem>>, vector<1x8x128xbf16>
    %56 = vector.shape_cast %55 : vector<1x8x128xbf16> to vector<8x128xbf16>
    %57 = arith.extf %56 : vector<8x128xbf16> to vector<8x128xf32>
    %cst_28 = arith.constant dense<0.000000e+00> : vector<8x128xf32>
    %58 = tpu.matmul %53, %3, %cst_28 {dimension_numbers = #tpu.dot_dimension_numbers<[1], [0], [0], [1], [0, 0, 1, 1], [], []>} : vector<8x128xbf16>, vector<128x128xbf16>, vector<8x128xf32> -> vector<8x128xf32>
    %59 = arith.addf %57, %58 : vector<8x128xf32>
    %c5_i32 = arith.constant 5 : i32
    %60 = arith.index_cast %c5_i32 : i32 to index
    %c0_29 = arith.constant 0 : index
    %c0_30 = arith.constant 0 : index
    %61 = vector.load %arg9[%60, %c0_29, %c0_30] : memref<8x8x128xf32, #tpu.memory_space<vmem>>, vector<1x8x128xf32>
    %62 = vector.shape_cast %61 : vector<1x8x128xf32> to vector<8x128xf32>
    %63 = vector.shape_cast %59 : vector<8x128xf32> to vector<1x8x128xf32>
    tpu.vector_store %arg9[%60, %c0_29, %c0_30], %63 {strides = array<i32>} : memref<8x8x128xf32, #tpu.memory_space<vmem>>, vector<1x8x128xf32>,
    %64 = arith.truncf %59 : vector<8x128xf32> to vector<8x128xbf16>
    %65 = arith.index_cast %c5_i32 : i32 to index
    %c0_31 = arith.constant 0 : index
    %c0_32 = arith.constant 0 : index
    %66 = vector.load %arg2[%65, %c0_31, %c0_32] : memref<8x8x128xbf16, #tpu.memory_space<vmem>>, vector<1x8x128xbf16>
    %67 = vector.shape_cast %66 : vector<1x8x128xbf16> to vector<8x128xbf16>
    %68 = arith.extf %67 : vector<8x128xbf16> to vector<8x128xf32>
    %cst_33 = arith.constant dense<0.000000e+00> : vector<8x128xf32>
    %69 = tpu.matmul %64, %3, %cst_33 {dimension_numbers = #tpu.dot_dimension_numbers<[1], [0], [0], [1], [0, 0, 1, 1], [], []>} : vector<8x128xbf16>, vector<128x128xbf16>, vector<8x128xf32> -> vector<8x128xf32>
    %70 = arith.addf %68, %69 : vector<8x128xf32>
    %c6_i32 = arith.constant 6 : i32
    %71 = arith.index_cast %c6_i32 : i32 to index
    %c0_34 = arith.constant 0 : index
    %c0_35 = arith.constant 0 : index
    %72 = vector.load %arg9[%71, %c0_34, %c0_35] : memref<8x8x128xf32, #tpu.memory_space<vmem>>, vector<1x8x128xf32>
    %73 = vector.shape_cast %72 : vector<1x8x128xf32> to vector<8x128xf32>
    %74 = vector.shape_cast %70 : vector<8x128xf32> to vector<1x8x128xf32>
    tpu.vector_store %arg9[%71, %c0_34, %c0_35], %74 {strides = array<i32>} : memref<8x8x128xf32, #tpu.memory_space<vmem>>, vector<1x8x128xf32>,
    %75 = arith.truncf %70 : vector<8x128xf32> to vector<8x128xbf16>
    %76 = arith.index_cast %c6_i32 : i32 to index
    %c0_36 = arith.constant 0 : index
    %c0_37 = arith.constant 0 : index
    %77 = vector.load %arg2[%76, %c0_36, %c0_37] : memref<8x8x128xbf16, #tpu.memory_space<vmem>>, vector<1x8x128xbf16>
    %78 = vector.shape_cast %77 : vector<1x8x128xbf16> to vector<8x128xbf16>
    %79 = arith.extf %78 : vector<8x128xbf16> to vector<8x128xf32>
    %cst_38 = arith.constant dense<0.000000e+00> : vector<8x128xf32>
    %80 = tpu.matmul %75, %3, %cst_38 {dimension_numbers = #tpu.dot_dimension_numbers<[1], [0], [0], [1], [0, 0, 1, 1], [], []>} : vector<8x128xbf16>, vector<128x128xbf16>, vector<8x128xf32> -> vector<8x128xf32>
    %81 = arith.addf %79, %80 : vector<8x128xf32>
    %c7_i32 = arith.constant 7 : i32
    %82 = arith.index_cast %c7_i32 : i32 to index
    %c0_39 = arith.constant 0 : index
    %c0_40 = arith.constant 0 : index
    %83 = vector.load %arg9[%82, %c0_39, %c0_40] : memref<8x8x128xf32, #tpu.memory_space<vmem>>, vector<1x8x128xf32>
    %84 = vector.shape_cast %83 : vector<1x8x128xf32> to vector<8x128xf32>
    %85 = vector.shape_cast %81 : vector<8x128xf32> to vector<1x8x128xf32>
    tpu.vector_store %arg9[%82, %c0_39, %c0_40], %85 {strides = array<i32>} : memref<8x8x128xf32, #tpu.memory_space<vmem>>, vector<1x8x128xf32>,
    %86 = arith.truncf %81 : vector<8x128xf32> to vector<8x128xbf16>
    %87 = arith.index_cast %c7_i32 : i32 to index
    %c0_41 = arith.constant 0 : index
    %c0_42 = arith.constant 0 : index
    %88 = vector.load %arg2[%87, %c0_41, %c0_42] : memref<8x8x128xbf16, #tpu.memory_space<vmem>>, vector<1x8x128xbf16>
    %89 = vector.shape_cast %88 : vector<1x8x128xbf16> to vector<8x128xbf16>
    %90 = arith.extf %89 : vector<8x128xbf16> to vector<8x128xf32>
    %cst_43 = arith.constant dense<0.000000e+00> : vector<8x128xf32>
    %91 = tpu.matmul %86, %3, %cst_43 {dimension_numbers = #tpu.dot_dimension_numbers<[1], [0], [0], [1], [0, 0, 1, 1], [], []>} : vector<8x128xbf16>, vector<128x128xbf16>, vector<8x128xf32> -> vector<8x128xf32>
    %92 = arith.addf %90, %91 : vector<8x128xf32>
    %c8_i32 = arith.constant 8 : i32
    %c0_44 = arith.constant 0 : index
    %c0_45 = arith.constant 0 : index
    %93 = vector.load %arg8[%c0_44, %c0_45] : memref<8x128xf32, #tpu.memory_space<vmem>>, vector<8x128xf32>
    tpu.vector_store %arg8[%c0_44, %c0_45], %92 {strides = array<i32>} : memref<8x128xf32, #tpu.memory_space<vmem>>, vector<8x128xf32>,
    %c0_46 = arith.constant 0 : index
    %c0_47 = arith.constant 0 : index
    %c0_48 = arith.constant 0 : index
    %94 = vector.load %arg9[%c0_46, %c0_47, %c0_48] : memref<8x8x128xf32, #tpu.memory_space<vmem>>, vector<8x8x128xf32>
    %95 = vector.shape_cast %94 : vector<8x8x128xf32> to vector<64x128xf32>
    %96 = arith.truncf %95 : vector<64x128xf32> to vector<64x128xbf16>
    %c0_49 = arith.constant 0 : index
    %c0_50 = arith.constant 0 : index
    %97 = vector.load %arg6[%c0_49, %c0_50] : memref<128x128xbf16, #tpu.memory_space<vmem>>, vector<128x128xbf16>
    %cst_51 = arith.constant dense<0.000000e+00> : vector<64x128xf32>
    %98 = tpu.matmul %96, %97, %cst_51 {dimension_numbers = #tpu.dot_dimension_numbers<[1], [0], [0], [1], [0, 0, 1, 1], [], []>} : vector<64x128xbf16>, vector<128x128xbf16>, vector<64x128xf32> -> vector<64x128xf32>
    %c0_52 = arith.constant 0 : index
    %c0_53 = arith.constant 0 : index
    %c0_54 = arith.constant 0 : index
    %99 = vector.load %arg3[%c0_52, %c0_53, %c0_54] : memref<8x8x128xbf16, #tpu.memory_space<vmem>>, vector<8x8x128xbf16>
    %100 = arith.extf %99 : vector<8x8x128xbf16> to vector<8x8x128xf32>
    %101 = vector.shape_cast %98 : vector<64x128xf32> to vector<8x8x128xf32>
    %102 = arith.addf %100, %101 : vector<8x8x128xf32>
    %c0_55 = arith.constant 0 : index
    %c0_56 = arith.constant 0 : index
    %c0_57 = arith.constant 0 : index
    %103 = vector.load %arg7[%c0_55, %c0_56, %c0_57] : memref<8x8x128xf32, #tpu.memory_space<vmem>>, vector<8x8x128xf32>
    tpu.vector_store %arg7[%c0_55, %c0_56, %c0_57], %102 {strides = array<i32>} : memref<8x8x128xf32, #tpu.memory_space<vmem>>, vector<8x8x128xf32>,
    return
  }
  func.func @transform_0(%arg0: i32, %arg1: i32) -> (i32, i32, i32) {
    %c0_i32 = arith.constant 0 : i32
    %c0_i32_0 = arith.constant 0 : i32
    return %arg1, %arg0, %c0_i32 : i32, i32, i32
  }
  func.func @transform_1(%arg0: i32, %arg1: i32) -> (i32, i32, i32) {
    %c0_i32 = arith.constant 0 : i32
    %c0_i32_0 = arith.constant 0 : i32
    return %arg1, %arg0, %c0_i32 : i32, i32, i32
  }
  func.func @transform_2(%arg0: i32, %arg1: i32) -> (i32, i32) {
    %c0_i32 = arith.constant 0 : i32
    %c0_i32_0 = arith.constant 0 : i32
    return %arg0, %c0_i32 : i32, i32
  }
  func.func @transform_3(%arg0: i32, %arg1: i32) -> (i32, i32) {
    %c0_i32 = arith.constant 0 : i32
    %c0_i32_0 = arith.constant 0 : i32
    %c0_i32_1 = arith.constant 0 : i32
    return %c0_i32, %c0_i32_0 : i32, i32
  }
  func.func @transform_4(%arg0: i32, %arg1: i32) -> (i32, i32) {
    %c0_i32 = arith.constant 0 : i32
    %c0_i32_0 = arith.constant 0 : i32
    %c0_i32_1 = arith.constant 0 : i32
    return %c0_i32, %c0_i32_0 : i32, i32
  }
  func.func @transform_5(%arg0: i32, %arg1: i32) -> (i32, i32, i32) {
    %c0_i32 = arith.constant 0 : i32
    %c0_i32_0 = arith.constant 0 : i32
    return %arg1, %arg0, %c0_i32 : i32, i32, i32
  }
}

</mosaic_0001>

<llo_original>
// kernel: rnn_layer_forward.1
$region0: #{rnn_layer_forward.1}
  #allocation0 [shape = 'u32[]', space=smem, size = 0x4, offset = 0x4, fixed_abs, tag = 'smem constant byte address 0x4 - core index']
  #allocation1 [shape = 'u32[144,128]{1,0:T(1,128)}', space=vmem, size = 0x12000, scoped, tag = 'internal scratch']
  #allocation2 [shape = 'f32[8,128]{1,0:T(8,128)}', space=vmem, size = 0x1000, scoped, tag = 'scratch operand']
  #allocation3 [shape = 'f32[8,8,128]{2,1,0:T(8,128)}', space=vmem, size = 0x8000, scoped, tag = 'scratch operand']
  %s0 = inlined_call_operand.vmem [shape: bf16[8,8,128], index: 0, kind: input, shape index: {}]
  %s1 = inlined_call_operand.vmem [shape: bf16[8,8,128], index: 1, kind: input, shape index: {}]
  %s2 = inlined_call_operand.vmem [shape: f32[8,128], index: 2, kind: input, shape index: {}]
  %s3 = inlined_call_operand.vmem [shape: bf16[128,128], index: 3, kind: input, shape index: {}]
  %s4 = inlined_call_operand.vmem [shape: bf16[128,128], index: 4, kind: input, shape index: {}]
  %s5 = inlined_call_operand.vmem [shape: f32[8,8,128], index: 5, kind: output, shape index: {}]
  %s6 = sld [smem:[#allocation0]]
  $region34: #{rnn_layer_forward.1} parent=0
    _
  %s8 = ssub.s32 1, %s6
  %s9 = scalar_select 0, %s8, %s6
  // Predicated region
  $region2: #{rnn_layer_forward.1} parent=0 // pred_check
    _
  $region3: #{rnn_layer_forward.1} parent=0 // pred_check_branch
    %11 = sbr.rel (0) target = $region5
  $region4: #{rnn_layer_forward.1} parent=0 // pred_region
    _
  $region5: #{rnn_layer_forward.1} parent=0 // pred_fallthru
    _
  // Predicated region
  $region6: #{rnn_layer_forward.1} parent=0 // pred_check
    _
  $region7: #{rnn_layer_forward.1} parent=0 // pred_check_branch
    %13 = sbr.rel (0) target = $region9
  $region8: #{rnn_layer_forward.1} parent=0 // pred_region
    _
  $region9: #{rnn_layer_forward.1} parent=0 // pred_fallthru
    _
  // Predicated region
  $region10: #{rnn_layer_forward.1} parent=0 // pred_check
    _
  $region11: #{rnn_layer_forward.1} parent=0 // pred_check_branch
    %15 = sbr.rel (0) target = $region13
  $region12: #{rnn_layer_forward.1} parent=0 // pred_region
    _
  $region13: #{rnn_layer_forward.1} parent=0 // pred_fallthru
    _
  // Predicated region
  $region14: #{rnn_layer_forward.1} parent=0 // pred_check
    _
  $region15: #{rnn_layer_forward.1} parent=0 // pred_check_branch
    %17 = sbr.rel (0) target = $region17
  $region16: #{rnn_layer_forward.1} parent=0 // pred_region
    _
  $region17: #{rnn_layer_forward.1} parent=0 // pred_fallthru
    _
  // Predicated region
  $region18: #{rnn_layer_forward.1} parent=0 // pred_check
    _
  $region19: #{rnn_layer_forward.1} parent=0 // pred_check_branch
    %19 = sbr.rel (0) target = $region21
  $region20: #{rnn_layer_forward.1} parent=0 // pred_region
    _
  $region21: #{rnn_layer_forward.1} parent=0 // pred_fallthru
    _
  %p21 = scmp.eq.s32.totalorder 0, 0
  // Predicated region
  $region22: #{rnn_layer_forward.1} parent=0 // pred_check
    %p22 = pneg %p21
  $region23: #{rnn_layer_forward.1} parent=0 // pred_check_branch
    %24 = sbr.rel (%p22) target = $region25
  $region24: #{rnn_layer_forward.1} parent=0 // pred_region
    %v25 = vld [vmem:[%s2] sm:$0xff]
    %26 = vst [vmem:[#allocation2] sm:$0xff] %v25
  $region25: #{rnn_layer_forward.1} parent=0 // pred_fallthru
    _
  %v27 = vld [vmem:[%s3] sm:$0xf]
  %v28 = vld [vmem:[%s3 + $0x4] sm:$0xf]
  %v29 = vld [vmem:[%s3 + $0x8] sm:$0xf]
  %v30 = vld [vmem:[%s3 + $0xc] sm:$0xf]
  %v31 = vld [vmem:[%s3 + $0x10] sm:$0xf]
  %v32 = vld [vmem:[%s3 + $0x14] sm:$0xf]
  %v33 = vld [vmem:[%s3 + $0x18] sm:$0xf]
  %v34 = vld [vmem:[%s3 + $0x1c] sm:$0xf]
  %v35 = vld [vmem:[%s3 + $0x20] sm:$0xf]
  %v36 = vld [vmem:[%s3 + $0x24] sm:$0xf]
  %v37 = vld [vmem:[%s3 + $0x28] sm:$0xf]
  %v38 = vld [vmem:[%s3 + $0x2c] sm:$0xf]
  %v39 = vld [vmem:[%s3 + $0x30] sm:$0xf]
  %v40 = vld [vmem:[%s3 + $0x34] sm:$0xf]
  %v41 = vld [vmem:[%s3 + $0x38] sm:$0xf]
  %v42 = vld [vmem:[%s3 + $0x3c] sm:$0xf]
  %v43 = vld [vmem:[#allocation2] sm:$0xff]
  %44 = vst [vmem:[#allocation3] sm:$0xff] %v43
  %v45 = vpack.c.bf16 %v43, %v43
  %v46 = vld [vmem:[%s0] sm:$0xf]
  %v47 = vunpack.c.l.bf16 %v46
  %v64 = vunpack.c.l.b16 %v27
  %v65 = vunpack.c.l.b16 %v28
  %v66 = vunpack.c.l.b16 %v29
  %v67 = vunpack.c.l.b16 %v30
  %v68 = vunpack.c.l.b16 %v31
  %v69 = vunpack.c.l.b16 %v32
  %v70 = vunpack.c.l.b16 %v33
  %v71 = vunpack.c.l.b16 %v34
  %v72 = vunpack.c.l.b16 %v35
  %v73 = vunpack.c.l.b16 %v36
  %v74 = vunpack.c.l.b16 %v37
  %v75 = vunpack.c.l.b16 %v38
  %v76 = vunpack.c.l.b16 %v39
  %v77 = vunpack.c.l.b16 %v40
  %v78 = vunpack.c.l.b16 %v41
  %v79 = vunpack.c.l.b16 %v42
  %v80 = vpack.c.b16 %v65, %v64
  %v81 = vpack.c.b16 %v67, %v66
  %v82 = vpack.c.b16 %v69, %v68
  %v83 = vpack.c.b16 %v71, %v70
  %v84 = vpack.c.b16 %v73, %v72
  %v85 = vpack.c.b16 %v75, %v74
  %v86 = vpack.c.b16 %v77, %v76
  %v87 = vpack.c.b16 %v79, %v78
  %96 = vmatprep.subr.bf16.mxu0 0
  %97 = vmatpush1.bf16.msra.mxu0 %v80
  %98 = vmatprep.subr.bf16.mxu0 0
  %99 = vmatpush1.bf16.msra.mxu0 %v81
  %100 = vmatprep.subr.bf16.mxu0 0
  %101 = vmatpush1.bf16.msra.mxu0 %v82
  %102 = vmatprep.subr.bf16.mxu0 0
  %103 = vmatpush1.bf16.msra.mxu0 %v83
  %104 = vmatprep.subr.bf16.mxu0 0
  %105 = vmatpush1.bf16.msra.mxu0 %v84
  %106 = vmatprep.subr.bf16.mxu0 0
  %107 = vmatpush1.bf16.msra.mxu0 %v85
  %108 = vmatprep.subr.bf16.mxu0 0
  %109 = vmatpush1.bf16.msra.mxu0 %v86
  %110 = vmatprep.subr.bf16.mxu0 0
  %111 = vmatpush1.bf16.msra.mxu0 %v87
  %112 = vmatprep.subr.bf16.mxu0 0
  %113 = vmatpush1.bf16.msra.mxu0 0
  %114 = vmatprep.subr.bf16.mxu0 0
  %115 = vmatpush1.bf16.msra.mxu0 0
  %116 = vmatprep.subr.bf16.mxu0 0
  %117 = vmatpush1.bf16.msra.mxu0 0
  %118 = vmatprep.subr.bf16.mxu0 0
  %119 = vmatpush1.bf16.msra.mxu0 0
  %120 = vmatprep.subr.bf16.mxu0 0
  %121 = vmatpush1.bf16.msra.mxu0 0
  %122 = vmatprep.subr.bf16.mxu0 0
  %123 = vmatpush1.bf16.msra.mxu0 0
  %124 = vmatprep.subr.bf16.mxu0 0
  %125 = vmatpush1.bf16.msra.mxu0 0
  %126 = vmatprep.subr.bf16.mxu0 0
  %127 = vmatpush1.bf16.msra.mxu0 0
  %128 = vmatprep.mubr.bf16.mxu0 0
  %129 = vmatmul.mubr.bf16.gmra.mrb[0].mxu0 %v45
  %v130 = vpop.f32.mrb[0].mxu0
  %v131 = vadd.f32 0.0, %v130
  %v132 = vpop.f32.mrb[0].mxu0
  %v133 = vpop.f32.mrb[0].mxu0
  %v134 = vpop.f32.mrb[0].mxu0
  %135 = vdwg.mxu0
  %v136 = vadd.f32 %v47, %v131
  %s137 = scalar_lea.vmem [#allocation3], 8
  %138 = vst [vmem:[%s137] sm:$0xff] %v136
  %v139 = vpack.c.bf16 %v136, %v136
  %s140 = scalar_lea.vmem %s0, 4
  %v141 = vld [vmem:[%s140] sm:$0xf]
  %v142 = vunpack.c.l.bf16 %v141
  %143 = vmatprep.subr.bf16.mxu0 0
  %144 = vmatpush1.bf16.msra.mxu0 %v80
  %145 = vmatprep.subr.bf16.mxu0 0
  %146 = vmatpush1.bf16.msra.mxu0 %v81
  %147 = vmatprep.subr.bf16.mxu0 0
  %148 = vmatpush1.bf16.msra.mxu0 %v82
  %149 = vmatprep.subr.bf16.mxu0 0
  %150 = vmatpush1.bf16.msra.mxu0 %v83
  %151 = vmatprep.subr.bf16.mxu0 0
  %152 = vmatpush1.bf16.msra.mxu0 %v84
  %153 = vmatprep.subr.bf16.mxu0 0
  %154 = vmatpush1.bf16.msra.mxu0 %v85
  %155 = vmatprep.subr.bf16.mxu0 0
  %156 = vmatpush1.bf16.msra.mxu0 %v86
  %157 = vmatprep.subr.bf16.mxu0 0
  %158 = vmatpush1.bf16.msra.mxu0 %v87
  %159 = vmatprep.subr.bf16.mxu0 0
  %160 = vmatpush1.bf16.msra.mxu0 0
  %161 = vmatprep.subr.bf16.mxu0 0
  %162 = vmatpush1.bf16.msra.mxu0 0
  %163 = vmatprep.subr.bf16.mxu0 0
  %164 = vmatpush1.bf16.msra.mxu0 0
  %165 = vmatprep.subr.bf16.mxu0 0
  %166 = vmatpush1.bf16.msra.mxu0 0
  %167 = vmatprep.subr.bf16.mxu0 0
  %168 = vmatpush1.bf16.msra.mxu0 0
  %169 = vmatprep.subr.bf16.mxu0 0
  %170 = vmatpush1.bf16.msra.mxu0 0
  %171 = vmatprep.subr.bf16.mxu0 0
  %172 = vmatpush1.bf16.msra.mxu0 0
  %173 = vmatprep.subr.bf16.mxu0 0
  %174 = vmatpush1.bf16.msra.mxu0 0
  %175 = vmatprep.mubr.bf16.mxu0 0
  %176 = vmatmul.mubr.bf16.gmra.mrb[0].mxu0 %v139
  %v177 = vpop.f32.mrb[0].mxu0
  %v178 = vadd.f32 0.0, %v177
  %v179 = vpop.f32.mrb[0].mxu0
  %v180 = vpop.f32.mrb[0].mxu0
  %v181 = vpop.f32.mrb[0].mxu0
  %182 = vdwg.mxu0
  %v183 = vadd.f32 %v142, %v178
  %s184 = scalar_lea.vmem [#allocation3], 16
  %185 = vst [vmem:[%s184] sm:$0xff] %v183
  %v186 = vpack.c.bf16 %v183, %v183
  %s187 = scalar_lea.vmem %s0, 8
  %v188 = vld [vmem:[%s187] sm:$0xf]
  %v189 = vunpack.c.l.bf16 %v188
  %190 = vmatprep.subr.bf16.mxu0 0
  %191 = vmatpush1.bf16.msra.mxu0 %v80
  %192 = vmatprep.subr.bf16.mxu0 0
  %193 = vmatpush1.bf16.msra.mxu0 %v81
  %194 = vmatprep.subr.bf16.mxu0 0
  %195 = vmatpush1.bf16.msra.mxu0 %v82
  %196 = vmatprep.subr.bf16.mxu0 0
  %197 = vmatpush1.bf16.msra.mxu0 %v83
  %198 = vmatprep.subr.bf16.mxu0 0
  %199 = vmatpush1.bf16.msra.mxu0 %v84
  %200 = vmatprep.subr.bf16.mxu0 0
  %201 = vmatpush1.bf16.msra.mxu0 %v85
  %202 = vmatprep.subr.bf16.mxu0 0
  %203 = vmatpush1.bf16.msra.mxu0 %v86
  %204 = vmatprep.subr.bf16.mxu0 0
  %205 = vmatpush1.bf16.msra.mxu0 %v87
  %206 = vmatprep.subr.bf16.mxu0 0
  %207 = vmatpush1.bf16.msra.mxu0 0
  %208 = vmatprep.subr.bf16.mxu0 0
  %209 = vmatpush1.bf16.msra.mxu0 0
  %210 = vmatprep.subr.bf16.mxu0 0
  %211 = vmatpush1.bf16.msra.mxu0 0
  %212 = vmatprep.subr.bf16.mxu0 0
  %213 = vmatpush1.bf16.msra.mxu0 0
  %214 = vmatprep.subr.bf16.mxu0 0
  %215 = vmatpush1.bf16.msra.mxu0 0
  %216 = vmatprep.subr.bf16.mxu0 0
  %217 = vmatpush1.bf16.msra.mxu0 0
  %218 = vmatprep.subr.bf16.mxu0 0
  %219 = vmatpush1.bf16.msra.mxu0 0
  %220 = vmatprep.subr.bf16.mxu0 0
  %221 = vmatpush1.bf16.msra.mxu0 0
  %222 = vmatprep.mubr.bf16.mxu0 0
  %223 = vmatmul.mubr.bf16.gmra.mrb[0].mxu0 %v186
  %v224 = vpop.f32.mrb[0].mxu0
  %v225 = vadd.f32 0.0, %v224
  %v226 = vpop.f32.mrb[0].mxu0
  %v227 = vpop.f32.mrb[0].mxu0
  %v228 = vpop.f32.mrb[0].mxu0
  %229 = vdwg.mxu0
  %v230 = vadd.f32 %v189, %v225
  %s231 = scalar_lea.vmem [#allocation3], 24
  %232 = vst [vmem:[%s231] sm:$0xff] %v230
  %v233 = vpack.c.bf16 %v230, %v230
  %s234 = scalar_lea.vmem %s0, 12
  %v235 = vld [vmem:[%s234] sm:$0xf]
  %v236 = vunpack.c.l.bf16 %v235
  %237 = vmatprep.subr.bf16.mxu0 0
  %238 = vmatpush1.bf16.msra.mxu0 %v80
  %239 = vmatprep.subr.bf16.mxu0 0
  %240 = vmatpush1.bf16.msra.mxu0 %v81
  %241 = vmatprep.subr.bf16.mxu0 0
  %242 = vmatpush1.bf16.msra.mxu0 %v82
  %243 = vmatprep.subr.bf16.mxu0 0
  %244 = vmatpush1.bf16.msra.mxu0 %v83
  %245 = vmatprep.subr.bf16.mxu0 0
  %246 = vmatpush1.bf16.msra.mxu0 %v84
  %247 = vmatprep.subr.bf16.mxu0 0
  %248 = vmatpush1.bf16.msra.mxu0 %v85
  %249 = vmatprep.subr.bf16.mxu0 0
  %250 = vmatpush1.bf16.msra.mxu0 %v86
  %251 = vmatprep.subr.bf16.mxu0 0
  %252 = vmatpush1.bf16.msra.mxu0 %v87
  %253 = vmatprep.subr.bf16.mxu0 0
  %254 = vmatpush1.bf16.msra.mxu0 0
  %255 = vmatprep.subr.bf16.mxu0 0
  %256 = vmatpush1.bf16.msra.mxu0 0
  %257 = vmatprep.subr.bf16.mxu0 0
  %258 = vmatpush1.bf16.msra.mxu0 0
  %259 = vmatprep.subr.bf16.mxu0 0
  %260 = vmatpush1.bf16.msra.mxu0 0
  %261 = vmatprep.subr.bf16.mxu0 0
  %262 = vmatpush1.bf16.msra.mxu0 0
  %263 = vmatprep.subr.bf16.mxu0 0
  %264 = vmatpush1.bf16.msra.mxu0 0
  %265 = vmatprep.subr.bf16.mxu0 0
  %266 = vmatpush1.bf16.msra.mxu0 0
  %267 = vmatprep.subr.bf16.mxu0 0
  %268 = vmatpush1.bf16.msra.mxu0 0
  %269 = vmatprep.mubr.bf16.mxu0 0
  %270 = vmatmul.mubr.bf16.gmra.mrb[0].mxu0 %v233
  %v271 = vpop.f32.mrb[0].mxu0
  %v272 = vadd.f32 0.0, %v271
  %v273 = vpop.f32.mrb[0].mxu0
  %v274 = vpop.f32.mrb[0].mxu0
  %v275 = vpop.f32.mrb[0].mxu0
  %276 = vdwg.mxu0
  %v277 = vadd.f32 %v236, %v272
  %s278 = scalar_lea.vmem [#allocation3], 32
  %279 = vst [vmem:[%s278] sm:$0xff] %v277
  %v280 = vpack.c.bf16 %v277, %v277
  %s281 = scalar_lea.vmem %s0, 16
  %v282 = vld [vmem:[%s281] sm:$0xf]
  %v283 = vunpack.c.l.bf16 %v282
  %284 = vmatprep.subr.bf16.mxu0 0
  %285 = vmatpush1.bf16.msra.mxu0 %v80
  %286 = vmatprep.subr.bf16.mxu0 0
  %287 = vmatpush1.bf16.msra.mxu0 %v81
  %288 = vmatprep.subr.bf16.mxu0 0
  %289 = vmatpush1.bf16.msra.mxu0 %v82
  %290 = vmatprep.subr.bf16.mxu0 0
  %291 = vmatpush1.bf16.msra.mxu0 %v83
  %292 = vmatprep.subr.bf16.mxu0 0
  %293 = vmatpush1.bf16.msra.mxu0 %v84
  %294 = vmatprep.subr.bf16.mxu0 0
  %295 = vmatpush1.bf16.msra.mxu0 %v85
  %296 = vmatprep.subr.bf16.mxu0 0
  %297 = vmatpush1.bf16.msra.mxu0 %v86
  %298 = vmatprep.subr.bf16.mxu0 0
  %299 = vmatpush1.bf16.msra.mxu0 %v87
  %300 = vmatprep.subr.bf16.mxu0 0
  %301 = vmatpush1.bf16.msra.mxu0 0
  %302 = vmatprep.subr.bf16.mxu0 0
  %303 = vmatpush1.bf16.msra.mxu0 0
  %304 = vmatprep.subr.bf16.mxu0 0
  %305 = vmatpush1.bf16.msra.mxu0 0
  %306 = vmatprep.subr.bf16.mxu0 0
  %307 = vmatpush1.bf16.msra.mxu0 0
  %308 = vmatprep.subr.bf16.mxu0 0
  %309 = vmatpush1.bf16.msra.mxu0 0
  %310 = vmatprep.subr.bf16.mxu0 0
  %311 = vmatpush1.bf16.msra.mxu0 0
  %312 = vmatprep.subr.bf16.mxu0 0
  %313 = vmatpush1.bf16.msra.mxu0 0
  %314 = vmatprep.subr.bf16.mxu0 0
  %315 = vmatpush1.bf16.msra.mxu0 0
  %316 = vmatprep.mubr.bf16.mxu0 0
  %317 = vmatmul.mubr.bf16.gmra.mrb[0].mxu0 %v280
  %v318 = vpop.f32.mrb[0].mxu0
  %v319 = vadd.f32 0.0, %v318
  %v320 = vpop.f32.mrb[0].mxu0
  %v321 = vpop.f32.mrb[0].mxu0
  %v322 = vpop.f32.mrb[0].mxu0
  %323 = vdwg.mxu0
  %v324 = vadd.f32 %v283, %v319
  %s325 = scalar_lea.vmem [#allocation3], 40
  %326 = vst [vmem:[%s325] sm:$0xff] %v324
  %v327 = vpack.c.bf16 %v324, %v324
  %s328 = scalar_lea.vmem %s0, 20
  %v329 = vld [vmem:[%s328] sm:$0xf]
  %v330 = vunpack.c.l.bf16 %v329
  %331 = vmatprep.subr.bf16.mxu0 0
  %332 = vmatpush1.bf16.msra.mxu0 %v80
  %333 = vmatprep.subr.bf16.mxu0 0
  %334 = vmatpush1.bf16.msra.mxu0 %v81
  %335 = vmatprep.subr.bf16.mxu0 0
  %336 = vmatpush1.bf16.msra.mxu0 %v82
  %337 = vmatprep.subr.bf16.mxu0 0
  %338 = vmatpush1.bf16.msra.mxu0 %v83
  %339 = vmatprep.subr.bf16.mxu0 0
  %340 = vmatpush1.bf16.msra.mxu0 %v84
  %341 = vmatprep.subr.bf16.mxu0 0
  %342 = vmatpush1.bf16.msra.mxu0 %v85
  %343 = vmatprep.subr.bf16.mxu0 0
  %344 = vmatpush1.bf16.msra.mxu0 %v86
  %345 = vmatprep.subr.bf16.mxu0 0
  %346 = vmatpush1.bf16.msra.mxu0 %v87
  %347 = vmatprep.subr.bf16.mxu0 0
  %348 = vmatpush1.bf16.msra.mxu0 0
  %349 = vmatprep.subr.bf16.mxu0 0
  %350 = vmatpush1.bf16.msra.mxu0 0
  %351 = vmatprep.subr.bf16.mxu0 0
  %352 = vmatpush1.bf16.msra.mxu0 0
  %353 = vmatprep.subr.bf16.mxu0 0
  %354 = vmatpush1.bf16.msra.mxu0 0
  %355 = vmatprep.subr.bf16.mxu0 0
  %356 = vmatpush1.bf16.msra.mxu0 0
  %357 = vmatprep.subr.bf16.mxu0 0
  %358 = vmatpush1.bf16.msra.mxu0 0
  %359 = vmatprep.subr.bf16.mxu0 0
  %360 = vmatpush1.bf16.msra.mxu0 0
  %361 = vmatprep.subr.bf16.mxu0 0
  %362 = vmatpush1.bf16.msra.mxu0 0
  %363 = vmatprep.mubr.bf16.mxu0 0
  %364 = vmatmul.mubr.bf16.gmra.mrb[0].mxu0 %v327
  %v365 = vpop.f32.mrb[0].mxu0
  %v366 = vadd.f32 0.0, %v365
  %v367 = vpop.f32.mrb[0].mxu0
  %v368 = vpop.f32.mrb[0].mxu0
  %v369 = vpop.f32.mrb[0].mxu0
  %370 = vdwg.mxu0
  %v371 = vadd.f32 %v330, %v366
  %s372 = scalar_lea.vmem [#allocation3], 48
  %373 = vst [vmem:[%s372] sm:$0xff] %v371
  %v374 = vpack.c.bf16 %v371, %v371
  %s375 = scalar_lea.vmem %s0, 24
  %v376 = vld [vmem:[%s375] sm:$0xf]
  %v377 = vunpack.c.l.bf16 %v376
  %378 = vmatprep.subr.bf16.mxu0 0
  %379 = vmatpush1.bf16.msra.mxu0 %v80
  %380 = vmatprep.subr.bf16.mxu0 0
  %381 = vmatpush1.bf16.msra.mxu0 %v81
  %382 = vmatprep.subr.bf16.mxu0 0
  %383 = vmatpush1.bf16.msra.mxu0 %v82
  %384 = vmatprep.subr.bf16.mxu0 0
  %385 = vmatpush1.bf16.msra.mxu0 %v83
  %386 = vmatprep.subr.bf16.mxu0 0
  %387 = vmatpush1.bf16.msra.mxu0 %v84
  %388 = vmatprep.subr.bf16.mxu0 0
  %389 = vmatpush1.bf16.msra.mxu0 %v85
  %390 = vmatprep.subr.bf16.mxu0 0
  %391 = vmatpush1.bf16.msra.mxu0 %v86
  %392 = vmatprep.subr.bf16.mxu0 0
  %393 = vmatpush1.bf16.msra.mxu0 %v87
  %394 = vmatprep.subr.bf16.mxu0 0
  %395 = vmatpush1.bf16.msra.mxu0 0
  %396 = vmatprep.subr.bf16.mxu0 0
  %397 = vmatpush1.bf16.msra.mxu0 0
  %398 = vmatprep.subr.bf16.mxu0 0
  %399 = vmatpush1.bf16.msra.mxu0 0
  %400 = vmatprep.subr.bf16.mxu0 0
  %401 = vmatpush1.bf16.msra.mxu0 0
  %402 = vmatprep.subr.bf16.mxu0 0
  %403 = vmatpush1.bf16.msra.mxu0 0
  %404 = vmatprep.subr.bf16.mxu0 0
  %405 = vmatpush1.bf16.msra.mxu0 0
  %406 = vmatprep.subr.bf16.mxu0 0
  %407 = vmatpush1.bf16.msra.mxu0 0
  %408 = vmatprep.subr.bf16.mxu0 0
  %409 = vmatpush1.bf16.msra.mxu0 0
  %410 = vmatprep.mubr.bf16.mxu0 0
  %411 = vmatmul.mubr.bf16.gmra.mrb[0].mxu0 %v374
  %v412 = vpop.f32.mrb[0].mxu0
  %v413 = vadd.f32 0.0, %v412
  %v414 = vpop.f32.mrb[0].mxu0
  %v415 = vpop.f32.mrb[0].mxu0
  %v416 = vpop.f32.mrb[0].mxu0
  %417 = vdwg.mxu0
  %v418 = vadd.f32 %v377, %v413
  %s419 = scalar_lea.vmem [#allocation3], 56
  %420 = vst [vmem:[%s419] sm:$0xff] %v418
  %v421 = vpack.c.bf16 %v418, %v418
  %s422 = scalar_lea.vmem %s0, 28
  %v423 = vld [vmem:[%s422] sm:$0xf]
  %v424 = vunpack.c.l.bf16 %v423
  %425 = vmatprep.subr.bf16.mxu0 0
  %426 = vmatpush1.bf16.msra.mxu0 %v80
  %427 = vmatprep.subr.bf16.mxu0 0
  %428 = vmatpush1.bf16.msra.mxu0 %v81
  %429 = vmatprep.subr.bf16.mxu0 0
  %430 = vmatpush1.bf16.msra.mxu0 %v82
  %431 = vmatprep.subr.bf16.mxu0 0
  %432 = vmatpush1.bf16.msra.mxu0 %v83
  %433 = vmatprep.subr.bf16.mxu0 0
  %434 = vmatpush1.bf16.msra.mxu0 %v84
  %435 = vmatprep.subr.bf16.mxu0 0
  %436 = vmatpush1.bf16.msra.mxu0 %v85
  %437 = vmatprep.subr.bf16.mxu0 0
  %438 = vmatpush1.bf16.msra.mxu0 %v86
  %439 = vmatprep.subr.bf16.mxu0 0
  %440 = vmatpush1.bf16.msra.mxu0 %v87
  %441 = vmatprep.subr.bf16.mxu0 0
  %442 = vmatpush1.bf16.msra.mxu0 0
  %443 = vmatprep.subr.bf16.mxu0 0
  %444 = vmatpush1.bf16.msra.mxu0 0
  %445 = vmatprep.subr.bf16.mxu0 0
  %446 = vmatpush1.bf16.msra.mxu0 0
  %447 = vmatprep.subr.bf16.mxu0 0
  %448 = vmatpush1.bf16.msra.mxu0 0
  %449 = vmatprep.subr.bf16.mxu0 0
  %450 = vmatpush1.bf16.msra.mxu0 0
  %451 = vmatprep.subr.bf16.mxu0 0
  %452 = vmatpush1.bf16.msra.mxu0 0
  %453 = vmatprep.subr.bf16.mxu0 0
  %454 = vmatpush1.bf16.msra.mxu0 0
  %455 = vmatprep.subr.bf16.mxu0 0
  %456 = vmatpush1.bf16.msra.mxu0 0
  %457 = vmatprep.mubr.bf16.mxu0 0
  %458 = vmatmul.mubr.bf16.gmra.mrb[0].mxu0 %v421
  %v459 = vpop.f32.mrb[0].mxu0
  %v460 = vadd.f32 0.0, %v459
  %v461 = vpop.f32.mrb[0].mxu0
  %v462 = vpop.f32.mrb[0].mxu0
  %v463 = vpop.f32.mrb[0].mxu0
  %464 = vdwg.mxu0
  %v465 = vadd.f32 %v424, %v460
  %466 = vst [vmem:[#allocation2] sm:$0xff] %v465
  %v467 = vld [vmem:[#allocation3] sm:$0xff]
  %v468 = vld [vmem:[#allocation3 + $0x8] sm:$0xff]
  %v469 = vld [vmem:[#allocation3 + $0x10] sm:$0xff]
  %v470 = vld [vmem:[#allocation3 + $0x18] sm:$0xff]
  %v471 = vld [vmem:[#allocation3 + $0x20] sm:$0xff]
  %v472 = vld [vmem:[#allocation3 + $0x28] sm:$0xff]
  %v473 = vld [vmem:[#allocation3 + $0x30] sm:$0xff]
  %v474 = vld [vmem:[#allocation3 + $0x38] sm:$0xff]
  %v475 = vpack.c.bf16 %v468, %v467
  %v476 = vpack.c.bf16 %v470, %v469
  %v477 = vpack.c.bf16 %v472, %v471
  %v478 = vpack.c.bf16 %v474, %v473
  %v479 = vld [vmem:[%s4] sm:$0xf]
  %v480 = vld [vmem:[%s4 + $0x4] sm:$0xf]
  %v481 = vld [vmem:[%s4 + $0x8] sm:$0xf]
  %v482 = vld [vmem:[%s4 + $0xc] sm:$0xf]
  %v483 = vld [vmem:[%s4 + $0x10] sm:$0xf]
  %v484 = vld [vmem:[%s4 + $0x14] sm:$0xf]
  %v485 = vld [vmem:[%s4 + $0x18] sm:$0xf]
  %v486 = vld [vmem:[%s4 + $0x1c] sm:$0xf]
  %v487 = vld [vmem:[%s4 + $0x20] sm:$0xf]
  %v488 = vld [vmem:[%s4 + $0x24] sm:$0xf]
  %v489 = vld [vmem:[%s4 + $0x28] sm:$0xf]
  %v490 = vld [vmem:[%s4 + $0x2c] sm:$0xf]
  %v491 = vld [vmem:[%s4 + $0x30] sm:$0xf]
  %v492 = vld [vmem:[%s4 + $0x34] sm:$0xf]
  %v493 = vld [vmem:[%s4 + $0x38] sm:$0xf]
  %v494 = vld [vmem:[%s4 + $0x3c] sm:$0xf]
  %v511 = vunpack.c.l.b16 %v479
  %v512 = vunpack.c.l.b16 %v480
  %v513 = vunpack.c.l.b16 %v481
  %v514 = vunpack.c.l.b16 %v482
  %v515 = vunpack.c.l.b16 %v483
  %v516 = vunpack.c.l.b16 %v484
  %v517 = vunpack.c.l.b16 %v485
  %v518 = vunpack.c.l.b16 %v486
  %v519 = vunpack.c.l.b16 %v487
  %v520 = vunpack.c.l.b16 %v488
  %v521 = vunpack.c.l.b16 %v489
  %v522 = vunpack.c.l.b16 %v490
  %v523 = vunpack.c.l.b16 %v491
  %v524 = vunpack.c.l.b16 %v492
  %v525 = vunpack.c.l.b16 %v493
  %v526 = vunpack.c.l.b16 %v494
  %v527 = vpack.c.b16 %v512, %v511
  %v528 = vpack.c.b16 %v514, %v513
  %v529 = vpack.c.b16 %v516, %v515
  %v530 = vpack.c.b16 %v518, %v517
  %v531 = vpack.c.b16 %v520, %v519
  %v532 = vpack.c.b16 %v522, %v521
  %v533 = vpack.c.b16 %v524, %v523
  %v534 = vpack.c.b16 %v526, %v525
  %543 = vmatprep.subr.bf16.mxu0 0
  %544 = vmatpush1.bf16.msra.mxu0 %v527
  %545 = vmatprep.subr.bf16.mxu0 0
  %546 = vmatpush1.bf16.msra.mxu0 %v528
  %547 = vmatprep.subr.bf16.mxu0 0
  %548 = vmatpush1.bf16.msra.mxu0 %v529
  %549 = vmatprep.subr.bf16.mxu0 0
  %550 = vmatpush1.bf16.msra.mxu0 %v530
  %551 = vmatprep.subr.bf16.mxu0 0
  %552 = vmatpush1.bf16.msra.mxu0 %v531
  %553 = vmatprep.subr.bf16.mxu0 0
  %554 = vmatpush1.bf16.msra.mxu0 %v532
  %555 = vmatprep.subr.bf16.mxu0 0
  %556 = vmatpush1.bf16.msra.mxu0 %v533
  %557 = vmatprep.subr.bf16.mxu0 0
  %558 = vmatpush1.bf16.msra.mxu0 %v534
  %559 = vmatprep.subr.bf16.mxu0 0
  %560 = vmatpush1.bf16.msra.mxu0 0
  %561 = vmatprep.subr.bf16.mxu0 0
  %562 = vmatpush1.bf16.msra.mxu0 0
  %563 = vmatprep.subr.bf16.mxu0 0
  %564 = vmatpush1.bf16.msra.mxu0 0
  %565 = vmatprep.subr.bf16.mxu0 0
  %566 = vmatpush1.bf16.msra.mxu0 0
  %567 = vmatprep.subr.bf16.mxu0 0
  %568 = vmatpush1.bf16.msra.mxu0 0
  %569 = vmatprep.subr.bf16.mxu0 0
  %570 = vmatpush1.bf16.msra.mxu0 0
  %571 = vmatprep.subr.bf16.mxu0 0
  %572 = vmatpush1.bf16.msra.mxu0 0
  %573 = vmatprep.subr.bf16.mxu0 0
  %574 = vmatpush1.bf16.msra.mxu0 0
  %575 = vmatprep.mubr.bf16.mxu0 0
  %576 = vmatmul.mubr.bf16.gmra.mrb[0].mxu0 %v475
  %v577 = vpop.f32.mrb[0].mxu0
  %v578 = vadd.f32 0.0, %v577
  %v579 = vpop.f32.mrb[0].mxu0
  %v580 = vpop.f32.mrb[0].mxu0
  %v581 = vadd.f32 0.0, %v580
  %v582 = vpop.f32.mrb[0].mxu0
  %583 = vmatprep.mubr.bf16.mxu0 0
  %584 = vmatmul.mubr.bf16.gmra.mrb[0].mxu0 %v476
  %v585 = vpop.f32.mrb[0].mxu0
  %v586 = vadd.f32 0.0, %v585
  %v587 = vpop.f32.mrb[0].mxu0
  %v588 = vpop.f32.mrb[0].mxu0
  %v589 = vadd.f32 0.0, %v588
  %v590 = vpop.f32.mrb[0].mxu0
  %591 = vmatprep.mubr.bf16.mxu0 0
  %592 = vmatmul.mubr.bf16.gmra.mrb[0].mxu0 %v477
  %v593 = vpop.f32.mrb[0].mxu0
  %v594 = vadd.f32 0.0, %v593
  %v595 = vpop.f32.mrb[0].mxu0
  %v596 = vpop.f32.mrb[0].mxu0
  %v597 = vadd.f32 0.0, %v596
  %v598 = vpop.f32.mrb[0].mxu0
  %599 = vmatprep.mubr.bf16.mxu0 0
  %600 = vmatmul.mubr.bf16.gmra.mrb[0].mxu0 %v478
  %v601 = vpop.f32.mrb[0].mxu0
  %v602 = vadd.f32 0.0, %v601
  %v603 = vpop.f32.mrb[0].mxu0
  %v604 = vpop.f32.mrb[0].mxu0
  %v605 = vadd.f32 0.0, %v604
  %v606 = vpop.f32.mrb[0].mxu0
  %607 = vdwg.mxu0
  %v608 = vld [vmem:[%s1] sm:$0xf]
  %v609 = vld [vmem:[%s1 + $0x4] sm:$0xf]
  %v610 = vld [vmem:[%s1 + $0x8] sm:$0xf]
  %v611 = vld [vmem:[%s1 + $0xc] sm:$0xf]
  %v612 = vld [vmem:[%s1 + $0x10] sm:$0xf]
  %v613 = vld [vmem:[%s1 + $0x14] sm:$0xf]
  %v614 = vld [vmem:[%s1 + $0x18] sm:$0xf]
  %v615 = vld [vmem:[%s1 + $0x1c] sm:$0xf]
  %v616 = vunpack.c.l.bf16 %v608
  %v617 = vunpack.c.l.bf16 %v609
  %v618 = vunpack.c.l.bf16 %v610
  %v619 = vunpack.c.l.bf16 %v611
  %v620 = vunpack.c.l.bf16 %v612
  %v621 = vunpack.c.l.bf16 %v613
  %v622 = vunpack.c.l.bf16 %v614
  %v623 = vunpack.c.l.bf16 %v615
  %v624 = vadd.f32 %v616, %v578
  %v625 = vadd.f32 %v617, %v581
  %v626 = vadd.f32 %v618, %v586
  %v627 = vadd.f32 %v619, %v589
  %v628 = vadd.f32 %v620, %v594
  %v629 = vadd.f32 %v621, %v597
  %v630 = vadd.f32 %v622, %v602
  %v631 = vadd.f32 %v623, %v605
  %632 = vst [vmem:[%s5] sm:$0xff] %v624
  %633 = vst [vmem:[%s5 + $0x8] sm:$0xff] %v625
  %634 = vst [vmem:[%s5 + $0x10] sm:$0xff] %v626
  %635 = vst [vmem:[%s5 + $0x18] sm:$0xff] %v627
  %636 = vst [vmem:[%s5 + $0x20] sm:$0xff] %v628
  %637 = vst [vmem:[%s5 + $0x28] sm:$0xff] %v629
  %638 = vst [vmem:[%s5 + $0x30] sm:$0xff] %v630
  %639 = vst [vmem:[%s5 + $0x38] sm:$0xff] %v631
  // Predicated region
  $region26: #{rnn_layer_forward.1} parent=0 // pred_check
    _
  $region27: #{rnn_layer_forward.1} parent=0 // pred_check_branch
    %641 = sbr.rel (0) target = $region29
  $region28: #{rnn_layer_forward.1} parent=0 // pred_region
    _
  $region29: #{rnn_layer_forward.1} parent=0 // pred_fallthru
    _
  // Predicated region
  $region30: #{rnn_layer_forward.1} parent=0 // pred_check
    _
  $region31: #{rnn_layer_forward.1} parent=0 // pred_check_branch
    %643 = sbr.rel (0) target = $region33
  $region32: #{rnn_layer_forward.1} parent=0 // pred_region
    _
  $region33: #{rnn_layer_forward.1} parent=0 // pred_fallthru
    _

</llo_original>
